<compile_context>
chip_gen: v5e
topology: v5e:2x2
jax: 0.10.0
libtpu: 0.0.40
codegen_flags: <defaults>
</compile_context>

<pallas_src>
import functools
import math

import jax
import jax.numpy as jnp
from jax import lax
from jax.experimental import pallas as pl
from jax.experimental.pallas import tpu as pltpu

_LANES = 128
_SUBLANES = 8
_ALIGN = _SUBLANES * _LANES  # 1024 elements == one f32 vreg


def _cdiv(a, b):
    return -(-a // b)


def _round_up(a, b):
    return _cdiv(a, b) * b


def _softplus_neg(d):
    # -log(sigmoid(d)) == softplus(-d); numerically stable for any |d|.
    return jnp.maximum(-d, 0.0) + jnp.log1p(jnp.exp(-jnp.abs(d)))


def _bpr_kernel(pos_ref, neg_ref, out_ref, acc_ref, *, rows, tile_rows):
    c = pl.program_id(0)      # slice (TensorCore shard on megacore chips)
    i = pl.program_id(1)      # sequential reduction axis
    n_i = pl.num_programs(1)

    @pl.when(i == 0)
    def _init():
        acc_ref[...] = jnp.zeros_like(acc_ref)

    d = pos_ref[...].astype(jnp.float32) - neg_ref[...].astype(jnp.float32)
    # TODO(synk): if a v7x profile shows the EUP slot binding, evaluate the
    # exp/log1p in bf16 there (not on v5e: no bf16 EUP).
    loss = _softplus_neg(d)

    # First logical row of this block; `rows` / `tile_rows` are static ints.
    row0 = (c * n_i + i) * tile_rows
    groups = tile_rows // _SUBLANES

    @pl.when(row0 + tile_rows <= rows)
    def _full_block():
        # Hot path: layout-free reshape + cross-vreg VALU adds into a
        # single-vreg (8,128) accumulator.  No masking, no XLU work.
        acc_ref[...] += loss.reshape(groups, _SUBLANES, _LANES).sum(axis=0)

    @pl.when(row0 + tile_rows > rows)
    def _tail_block():
        # Only the trailing (partially out-of-range) block pays for masking.
        # Out-of-range rows contain unspecified data; the select zeroes them.
        rix = row0 + lax.broadcasted_iota(jnp.int32, (tile_rows, _LANES), 0)
        masked = jnp.where(rix < rows, loss, 0.0)
        acc_ref[...] += masked.reshape(groups, _SUBLANES, _LANES).sum(axis=0)

    @pl.when(i == n_i - 1)
    def _epilogue():
        # Full unmasked (1,8,128) store; lane/sublane reduce + mean happen in
        # the wrapper on the tiny partials array.
        out_ref[...] = acc_ref[...].reshape(1, _SUBLANES, _LANES)


def _default_num_slices():
    # TODO(synk): on v7x, confirm the outer "parallel" axis really shards
    # across both TensorCores; if not, switch it to pltpu.CORE_PARALLEL.
    try:
        kind = jax.devices()[0].device_kind.lower()
    except Exception:
        return 1
    return 2 if "v7" in kind else 1


def _plan_tiling(rows, max_tile_rows, num_slices):
    """Pick (num_slices, tile_rows, tiles_per_slice) such that every grid block
    starts strictly inside the array (at most one partial trailing block; never
    a fully out-of-range block)."""
    max_tile_rows = max(_SUBLANES, _round_up(max_tile_rows, _SUBLANES))
    num_slices = max(1, min(num_slices, rows // _SUBLANES))
    while True:
        rows_per_slice = _cdiv(rows, num_slices)
        n_tiles = _cdiv(rows_per_slice, max_tile_rows)
        tile_rows = min(_round_up(_cdiv(rows_per_slice, n_tiles), _SUBLANES),
                        max_tile_rows)
        tiles_per_slice = _cdiv(rows_per_slice, tile_rows)
        if num_slices == 1 or (num_slices * tiles_per_slice - 1) * tile_rows < rows:
            return num_slices, tile_rows, tiles_per_slice
        num_slices -= 1


def bpr_loss(pos_scores, neg_scores, *, max_tile_rows=8192, num_slices=None):
    """BPR loss: mean(-log(sigmoid(pos_scores - neg_scores))) over all elements."""
    assert pos_scores.shape == neg_scores.shape, "score shapes must match"
    assert jnp.issubdtype(pos_scores.dtype, jnp.floating), "float scores required"
    assert jnp.issubdtype(neg_scores.dtype, jnp.floating), "float scores required"
    total = math.prod(pos_scores.shape) if pos_scores.shape else 1
    assert total > 0, "empty input"

    if num_slices is None:
        num_slices = _default_num_slices()

    pos_flat = jnp.ravel(pos_scores)
    neg_flat = jnp.ravel(neg_scores)

    # Kernel handles the largest 1024-aligned prefix; the <1024-element
    # remainder is a tiny fused elementwise+sum in plain JAX (no padding, no
    # sentinel values).
    aligned = (total // _ALIGN) * _ALIGN
    if aligned < total:
        dt = (pos_flat[aligned:].astype(jnp.float32)
              - neg_flat[aligned:].astype(jnp.float32))
        tail_sum = jnp.sum(_softplus_neg(dt))
    else:
        tail_sum = jnp.float32(0.0)

    if aligned == 0:
        return tail_sum / jnp.float32(total)

    rows = aligned // _LANES  # multiple of 8 by construction
    if aligned == total:
        # Zero-copy fast path: ravel + reshape of a contiguous array is free.
        pos2d = pos_flat.reshape(rows, _LANES)
        neg2d = neg_flat.reshape(rows, _LANES)
    else:
        # Ragged case: prefix slice of the aligned bulk (much cheaper than the
        # old full pad+concatenate of both inputs).
        pos2d = pos_flat[:aligned].reshape(rows, _LANES)
        neg2d = neg_flat[:aligned].reshape(rows, _LANES)

    num_slices, tile_rows, tiles_per_slice = _plan_tiling(
        rows, max_tile_rows, num_slices)

    in_map = lambda c, i: (c * tiles_per_slice + i, 0)

    # VMEM budget: 2 inputs x 2 pipeline buffers x block + a few f32 blocks of
    # elementwise temporaries + headroom (clamped well under physical VMEM).
    in_block_bytes = tile_rows * _LANES * pos2d.dtype.itemsize
    f32_block_bytes = tile_rows * _LANES * 4
    vmem_limit = 4 * in_block_bytes + 6 * f32_block_bytes + (2 << 20)
    vmem_limit = int(max(16 << 20, min(vmem_limit, 56 << 20)))

    kernel = functools.partial(_bpr_kernel, rows=rows, tile_rows=tile_rows)

    partials = pl.pallas_call(
        kernel,
        out_shape=jax.ShapeDtypeStruct((num_slices, _SUBLANES, _LANES),
                                       jnp.float32),
        grid_spec=pltpu.PrefetchScalarGridSpec(
            num_scalar_prefetch=0,
            grid=(num_slices, tiles_per_slice),
            in_specs=[
                pl.BlockSpec((tile_rows, _LANES), in_map),
                pl.BlockSpec((tile_rows, _LANES), in_map),
            ],
            out_specs=pl.BlockSpec((1, _SUBLANES, _LANES),
                                   lambda c, i: (c, 0, 0)),
            scratch_shapes=[pltpu.VMEM((_SUBLANES, _LANES), jnp.float32)],
        ),
        compiler_params=pltpu.CompilerParams(
            # Outer axis shards across TensorCores on megacore chips; inner
            # axis is the sequential reduction into the scratch accumulator.
            dimension_semantics=("parallel", "arbitrary"),
            vmem_limit_bytes=vmem_limit,
        ),
    )(pos2d, neg2d)

    # Tiny final reduce + mean in plain JAX.
    return (jnp.sum(partials) + tail_sum) / jnp.float32(total)


def _bpr_ref(pos_scores, neg_scores):
    d = pos_scores.astype(jnp.float32) - neg_scores.astype(jnp.float32)
    return jnp.mean(-jnp.log(jax.nn.sigmoid(d)))


if __name__ == "__main__":
    key = jax.random.PRNGKey(0)
    k1, k2, k3, k4, k5, k6 = jax.random.split(key, 6)

    # 1) Aligned fast path (zero-copy reshape, single full block).
    pos = jax.random.normal(k1, (16, 128), dtype=jnp.float32)
    neg = jax.random.normal(k2, (16, 128), dtype=jnp.float32)
    out = jax.block_until_ready(bpr_loss(pos, neg))
    ref = jax.block_until_ready(_bpr_ref(pos, neg))
    assert jnp.allclose(out, ref, rtol=1e-5, atol=1e-5), (out, ref)

    # 2) Ragged shape: <1024-element tail handled in plain JAX, bulk in-kernel.
    pos_r = jax.random.normal(k3, (23, 100), dtype=jnp.float32)
    neg_r = jax.random.normal(k4, (23, 100), dtype=jnp.float32)
    out_r = jax.block_until_ready(bpr_loss(pos_r, neg_r))
    ref_r = jax.block_until_ready(_bpr_ref(pos_r, neg_r))
    assert jnp.allclose(out_r, ref_r, rtol=1e-5, atol=1e-5), (out_r, ref_r)

    # 3) Two slices + partial trailing block (exercises the masked branch).
    pos_m = jax.random.normal(k5, (24, 128), dtype=jnp.float32)
    neg_m = jax.random.normal(k6, (24, 128), dtype=jnp.float32)
    out_m = jax.block_until_ready(bpr_loss(pos_m, neg_m, num_slices=2))
    ref_m = jax.block_until_ready(_bpr_ref(pos_m, neg_m))
    assert jnp.allclose(out_m, ref_m, rtol=1e-5, atol=1e-5), (out_m, ref_m)

    # 4) bf16 scores (kernel upcasts in VMEM; halves HBM traffic).
    pos_b = pos.astype(jnp.bfloat16)
    neg_b = neg.astype(jnp.bfloat16)
    out_b = jax.block_until_ready(bpr_loss(pos_b, neg_b))
    ref_b = jax.block_until_ready(_bpr_ref(pos_b, neg_b))
    assert jnp.allclose(out_b, ref_b, rtol=1e-5, atol=1e-5), (out_b, ref_b)

    print("KERNEL_OK")
</pallas_src>

<mosaic_0001>
module attributes {stable_mosaic.version = 11 : i64} {
  func.func @_bpr_kernel(%arg0: i32, %arg1: i32, %arg2: memref<16x128xf32, #tpu.memory_space<vmem>>, %arg3: memref<16x128xf32, #tpu.memory_space<vmem>>, %arg4: memref<1x8x128xf32, #tpu.memory_space<vmem>>, %arg5: memref<8x128xf32, #tpu.memory_space<vmem>>) attributes {dimension_semantics = [#tpu.dimension_semantics<parallel>, #tpu.dimension_semantics<arbitrary>], iteration_bounds = array<i64: 1, 1>, scalar_prefetch = 0 : i64, scratch_operands = 1 : i64, tpu.core_type = #tpu.core_type<tc>, window_params = [{transform_indices = @transform_0, window_bounds = array<i64: 16, 128>}, {transform_indices = @transform_1, window_bounds = array<i64: 16, 128>}, {transform_indices = @transform_2, window_bounds = array<i64: 1, 8, 128>}]} {
    %c0_i32 = arith.constant 0 : i32
    %0 = arith.cmpi eq, %arg1, %c0_i32 : i32
    %1 = arith.extui %0 : i1 to i32
    %c0_i32_0 = arith.constant 0 : i32
    %2 = arith.cmpi ne, %1, %c0_i32_0 : i32
    scf.if %2 {
      %cst_14 = arith.constant 0.000000e+00 : f32
      %30 = vector.broadcast %cst_14 : f32 to vector<8x128xf32>
      %c0_15 = arith.constant 0 : index
      %c0_16 = arith.constant 0 : index
      %31 = vector.load %arg5[%c0_15, %c0_16] : memref<8x128xf32, #tpu.memory_space<vmem>>, vector<8x128xf32>
      tpu.vector_store %arg5[%c0_15, %c0_16], %30 {strides = array<i32>} : memref<8x128xf32, #tpu.memory_space<vmem>>, vector<8x128xf32>,
    } else {
    }
    %c0 = arith.constant 0 : index
    %c0_1 = arith.constant 0 : index
    %3 = vector.load %arg2[%c0, %c0_1] : memref<16x128xf32, #tpu.memory_space<vmem>>, vector<16x128xf32>
    %c0_2 = arith.constant 0 : index
    %c0_3 = arith.constant 0 : index
    %4 = vector.load %arg3[%c0_2, %c0_3] : memref<16x128xf32, #tpu.memory_space<vmem>>, vector<16x128xf32>
    %5 = arith.subf %3, %4 : vector<16x128xf32>
    %cst = arith.constant 0.000000e+00 : f32
    %6 = vector.broadcast %cst : f32 to vector<16x128xf32>
    %7 = arith.subf %6, %5 : vector<16x128xf32>
    %cst_4 = arith.constant 0.000000e+00 : f32
    %8 = vector.broadcast %cst_4 : f32 to vector<16x128xf32>
    %9 = arith.maximumf %7, %8 : vector<16x128xf32>
    %10 = math.absf %5 : vector<16x128xf32>
    %cst_5 = arith.constant 0.000000e+00 : f32
    %11 = vector.broadcast %cst_5 : f32 to vector<16x128xf32>
    %12 = arith.subf %11, %10 : vector<16x128xf32>
    %13 = math.exp %12 : vector<16x128xf32>
    %14 = math.log1p %13 : vector<16x128xf32>
    %15 = arith.addf %9, %14 : vector<16x128xf32>
    %c1_i32 = arith.constant 1 : i32
    %16 = arith.muli %arg0, %c1_i32 : i32
    %17 = arith.addi %16, %arg1 : i32
    %c16_i32 = arith.constant 16 : i32
    %18 = arith.muli %17, %c16_i32 : i32
    %c16_i32_6 = arith.constant 16 : i32
    %19 = arith.addi %18, %c16_i32_6 : i32
    %c16_i32_7 = arith.constant 16 : i32
    %20 = arith.cmpi sle, %19, %c16_i32_7 : i32
    %21 = arith.extui %20 : i1 to i32
    %c0_i32_8 = arith.constant 0 : i32
    %22 = arith.cmpi ne, %21, %c0_i32_8 : i32
    scf.if %22 {
      %c0_14 = arith.constant 0 : index
      %c0_15 = arith.constant 0 : index
      %30 = vector.load %arg5[%c0_14, %c0_15] : memref<8x128xf32, #tpu.memory_space<vmem>>, vector<8x128xf32>
      %31 = vector.shape_cast %15 : vector<16x128xf32> to vector<2x8x128xf32>
      %cst_16 = arith.constant dense<0.000000e+00> : vector<8x128xf32>
      %32 = vector.multi_reduction <add>, %31, %cst_16 [0] : vector<2x8x128xf32> to vector<8x128xf32>
      %33 = arith.addf %30, %32 : vector<8x128xf32>
      %c0_17 = arith.constant 0 : index
      %c0_18 = arith.constant 0 : index
      %34 = vector.load %arg5[%c0_17, %c0_18] : memref<8x128xf32, #tpu.memory_space<vmem>>, vector<8x128xf32>
      tpu.vector_store %arg5[%c0_17, %c0_18], %33 {strides = array<i32>} : memref<8x128xf32, #tpu.memory_space<vmem>>, vector<8x128xf32>,
    } else {
    }
    %c16_i32_9 = arith.constant 16 : i32
    %23 = arith.addi %18, %c16_i32_9 : i32
    %c16_i32_10 = arith.constant 16 : i32
    %24 = arith.cmpi sgt, %23, %c16_i32_10 : i32
    %25 = arith.extui %24 : i1 to i32
    %c0_i32_11 = arith.constant 0 : i32
    %26 = arith.cmpi ne, %25, %c0_i32_11 : i32
    scf.if %26 {
      %30 = tpu.iota {dimensions = array<i32: 0>} : vector<16x128xi32>
      %31 = vector.broadcast %18 : i32 to vector<16x128xi32>
      %32 = arith.addi %31, %30 : vector<16x128xi32>
      %c16_i32_14 = arith.constant 16 : i32
      %33 = vector.broadcast %c16_i32_14 : i32 to vector<16x128xi32>
      %34 = arith.cmpi slt, %32, %33 : vector<16x128xi32>
      %cst_15 = arith.constant 0.000000e+00 : f32
      %35 = vector.broadcast %cst_15 : f32 to vector<16x128xf32>
      %36 = arith.select %34, %15, %35 : vector<16x128xi1>, vector<16x128xf32>
      %c0_16 = arith.constant 0 : index
      %c0_17 = arith.constant 0 : index
      %37 = vector.load %arg5[%c0_16, %c0_17] : memref<8x128xf32, #tpu.memory_space<vmem>>, vector<8x128xf32>
      %38 = vector.shape_cast %36 : vector<16x128xf32> to vector<2x8x128xf32>
      %cst_18 = arith.constant dense<0.000000e+00> : vector<8x128xf32>
      %39 = vector.multi_reduction <add>, %38, %cst_18 [0] : vector<2x8x128xf32> to vector<8x128xf32>
      %40 = arith.addf %37, %39 : vector<8x128xf32>
      %c0_19 = arith.constant 0 : index
      %c0_20 = arith.constant 0 : index
      %41 = vector.load %arg5[%c0_19, %c0_20] : memref<8x128xf32, #tpu.memory_space<vmem>>, vector<8x128xf32>
      tpu.vector_store %arg5[%c0_19, %c0_20], %40 {strides = array<i32>} : memref<8x128xf32, #tpu.memory_space<vmem>>, vector<8x128xf32>,
    } else {
    }
    %c0_i32_12 = arith.constant 0 : i32
    %27 = arith.cmpi eq, %arg1, %c0_i32_12 : i32
    %28 = arith.extui %27 : i1 to i32
    %c0_i32_13 = arith.constant 0 : i32
    %29 = arith.cmpi ne, %28, %c0_i32_13 : i32
    scf.if %29 {
      %c0_14 = arith.constant 0 : index
      %c0_15 = arith.constant 0 : index
      %30 = vector.load %arg5[%c0_14, %c0_15] : memref<8x128xf32, #tpu.memory_space<vmem>>, vector<8x128xf32>
      %31 = vector.shape_cast %30 : vector<8x128xf32> to vector<1x8x128xf32>
      %c0_16 = arith.constant 0 : index
      %c0_17 = arith.constant 0 : index
      %c0_18 = arith.constant 0 : index
      %32 = vector.load %arg4[%c0_16, %c0_17, %c0_18] : memref<1x8x128xf32, #tpu.memory_space<vmem>>, vector<1x8x128xf32>
      tpu.vector_store %arg4[%c0_16, %c0_17, %c0_18], %31 {strides = array<i32>} : memref<1x8x128xf32, #tpu.memory_space<vmem>>, vector<1x8x128xf32>,
    } else {
    }
    return
  }
  func.func @transform_0(%arg0: i32, %arg1: i32) -> (i32, i32) {
    %c1_i32 = arith.constant 1 : i32
    %0 = arith.muli %arg0, %c1_i32 : i32
    %1 = arith.addi %0, %arg1 : i32
    %c0_i32 = arith.constant 0 : i32
    %c0_i32_0 = arith.constant 0 : i32
    return %1, %c0_i32 : i32, i32
  }
  func.func @transform_1(%arg0: i32, %arg1: i32) -> (i32, i32) {
    %c1_i32 = arith.constant 1 : i32
    %0 = arith.muli %arg0, %c1_i32 : i32
    %1 = arith.addi %0, %arg1 : i32
    %c0_i32 = arith.constant 0 : i32
    %c0_i32_0 = arith.constant 0 : i32
    return %1, %c0_i32 : i32, i32
  }
  func.func @transform_2(%arg0: i32, %arg1: i32) -> (i32, i32, i32) {
    %c0_i32 = arith.constant 0 : i32
    %c0_i32_0 = arith.constant 0 : i32
    %c0_i32_1 = arith.constant 0 : i32
    return %arg0, %c0_i32, %c0_i32_0 : i32, i32, i32
  }
}

</mosaic_0001>

<llo_original>
// kernel: tpu_custom_call.1
$region0: #{tpu_custom_call.1}
  #allocation0 [shape = 'u32[]', space=smem, size = 0x4, offset = 0x4, fixed_abs, tag = 'smem constant byte address 0x4 - core index']
  #allocation1 [shape = 'u32[72,128]{1,0:T(1,128)}', space=vmem, size = 0x9000, scoped, tag = 'internal scratch']
  #allocation2 [shape = 'f32[8,128]{1,0:T(8,128)}', space=vmem, size = 0x1000, scoped, tag = 'scratch operand']
  %s0 = inlined_call_operand.hbm [shape: f32[16,128], index: 0, kind: input, shape index: {}]
  %s1 = inlined_call_operand.hbm [shape: f32[16,128], index: 1, kind: input, shape index: {}]
  %s2 = inlined_call_operand.hbm [shape: f32[1,8,128], index: 2, kind: output, shape index: {}]
  %s3 = sld [smem:[#allocation0]]
  $region42: #{tpu_custom_call.1} parent=0
    _
  %s5 = ssub.s32 1, %s3
  %s6 = scalar_select 0, %s5, %s3
  $region1: #{tpu_custom_call.1} parent=0
    #allocation3 [shape = 'u8[8192]{0}', space=vmem, size = 0x2000, scoped, tag = 'input window, operand 0, single buffered']
    #allocation4 [shape = 's32[1]{0}', space=sflag, size = 0x4, scoped, tag = 'scoped memory for tpu_custom_call.1']
    #allocation5 [shape = 's32[1]{0}', space=sflag, size = 0x4, scoped, tag = 'scoped memory for tpu_custom_call.1']
    #allocation6 [shape = 'u8[8192]{0}', space=vmem, size = 0x2000, scoped, tag = 'input window, operand 1, single buffered']
    #allocation7 [shape = 's32[1]{0}', space=sflag, size = 0x4, scoped, tag = 'scoped memory for tpu_custom_call.1']
    #allocation8 [shape = 'u8[4096]{0}', space=vmem, size = 0x1000, scoped, tag = 'output window, operand 0, single buffered']
    %7 = vsyncpa [#allocation4], 0
    %8 = vsyncpa [#allocation7], 0
    %9 = vsyncpa [#allocation5], 0
    // Predicated region
    $region2: #{tpu_custom_call.1} parent=1 // pred_check
      _
    $region3: #{tpu_custom_call.1} parent=1 // pred_check_branch
      %11 = sbr.rel (0) target = $region5
    $region4: #{tpu_custom_call.1} parent=1 // pred_region
      %s12 = sadd.s32 0, 0
      %s13 = smul.u32 2, %s12
      %15 = vsyncadd [#allocation4], 0
      %s16 = smul.addr %s13, 8
      %s17 = scalar_lea.hbm %s0, %s16
      %s18 = sshll.u32 %s17, 4
      %s19 = int_to_ptr.hbm [resolvable:$true] %s18
      %s20 = sshll.u32 [#allocation3], 4
      %s21 = int_to_ptr.vmem [resolvable:$true] %s20
      %26 = dma.hbm_to_vmem [thread:$0]  %s19, 256, %s21, [#allocation4], 128, 128, 8
    $region5: #{tpu_custom_call.1} parent=1 // pred_fallthru
      _
    // Predicated region
    $region6: #{tpu_custom_call.1} parent=1 // pred_check
      _
    $region7: #{tpu_custom_call.1} parent=1 // pred_check_branch
      %28 = sbr.rel (0) target = $region9
    $region8: #{tpu_custom_call.1} parent=1 // pred_region
      %s29 = sadd.s32 0, 0
      %s30 = smul.u32 2, %s29
      %32 = vsyncadd [#allocation7], 0
      %s33 = smul.addr %s30, 8
      %s34 = scalar_lea.hbm %s1, %s33
      %s35 = sshll.u32 %s34, 4
      %s36 = int_to_ptr.hbm [resolvable:$true] %s35
      %s37 = sshll.u32 [#allocation6], 4
      %s38 = int_to_ptr.vmem [resolvable:$true] %s37
      %43 = dma.hbm_to_vmem [thread:$0]  %s36, 256, %s38, [#allocation7], 128, 128, 8
    $region9: #{tpu_custom_call.1} parent=1 // pred_fallthru
      _
    // Predicated region
    $region10: #{tpu_custom_call.1} parent=1 // pred_check
      _
    $region11: #{tpu_custom_call.1} parent=1 // pred_check_branch
      %45 = sbr.rel (0) target = $region13
    $region12: #{tpu_custom_call.1} parent=1 // pred_region
      %47 = dma.done [#allocation4], 256
    $region13: #{tpu_custom_call.1} parent=1 // pred_fallthru
      _
    // Predicated region
    $region14: #{tpu_custom_call.1} parent=1 // pred_check
      _
    $region15: #{tpu_custom_call.1} parent=1 // pred_check_branch
      %49 = sbr.rel (0) target = $region17
    $region16: #{tpu_custom_call.1} parent=1 // pred_region
      %51 = dma.done [#allocation7], 256
    $region17: #{tpu_custom_call.1} parent=1 // pred_fallthru
      _
    %s52 = sadd.s32 0, 0
    %s53 = smul.u32 2, %s52
    %s54 = sadd.s32 0, 0
    %s55 = smul.u32 2, %s54
    %p56 = scmp.eq.s32.totalorder 0, 0
    // Predicated region
    $region18: #{tpu_custom_call.1} parent=1 // pred_check
      %p57 = pneg %p56
    $region19: #{tpu_custom_call.1} parent=1 // pred_check_branch
      %59 = sbr.rel (%p57) target = $region21
    $region20: #{tpu_custom_call.1} parent=1 // pred_region
      %60 = vst [vmem:[#allocation2] sm:$0xff] 0.0
    $region21: #{tpu_custom_call.1} parent=1 // pred_fallthru
      _
    %v61 = vld [vmem:[#allocation3] sm:$0xff]
    %v62 = vld [vmem:[#allocation3 + $0x8] sm:$0xff]
    %v63 = vld [vmem:[#allocation6] sm:$0xff]
    %v64 = vld [vmem:[#allocation6 + $0x8] sm:$0xff]
    %v65 = vsub.f32 %v61, %v63
    %v66 = vsub.f32 %v62, %v64
    %v67 = vsub.f32 0.0, %v65
    %v68 = vsub.f32 0.0, %v66
    %v69 = vmax.f32 %v67, 0.0
    %v70 = vmax.f32 %v68, 0.0
    %v71 = vand.u32 2147483647, %v65
    %v72 = vand.u32 2147483647, %v66
    %v73 = vsub.f32 0.0, %v71
    %v74 = vsub.f32 0.0, %v72
    %v75 = vmul.f32 %v73, 1.442695
    %v76 = vpow.pop %v75
    %v77 = vmul.f32 %v74, 1.442695
    %v78 = vpow.pop %v77
    %v79 = vadd.f32 %v76, 1.0
    %v80 = vlog2.pop %v79
    %v81 = vmul.f32 %v80, 0.6931472
    %v82 = vmul.f32 -0.5, %v76
    %v83 = vadd.f32 %v82, 1.0
    %v84 = vmul.f32 %v83, %v76
    %v85 = vand.u32 2147483647, %v76
    %vm86 = vcmp.lt.f32.partialorder %v85, 0.0004427343
    %v87 = vsel %vm86, %v84, %v81
    %v88 = vadd.f32 %v78, 1.0
    %v89 = vlog2.pop %v88
    %v90 = vmul.f32 %v89, 0.6931472
    %v91 = vmul.f32 -0.5, %v78
    %v92 = vadd.f32 %v91, 1.0
    %v93 = vmul.f32 %v92, %v78
    %v94 = vand.u32 2147483647, %v78
    %vm95 = vcmp.lt.f32.partialorder %v94, 0.0004427343
    %v96 = vsel %vm95, %v93, %v90
    %v97 = vadd.f32 %v69, %v87
    %v98 = vadd.f32 %v70, %v96
    %s99 = sadd.s32 0, 0
    %s100 = smul.u32 %s99, 16
    %s101 = sadd.s32 %s100, 16
    %p102 = scmp.le.s32.totalorder %s101, 16
    // Predicated region
    $region22: #{tpu_custom_call.1} parent=1 // pred_check
      %p103 = pneg %p102
    $region23: #{tpu_custom_call.1} parent=1 // pred_check_branch
      %105 = sbr.rel (%p103) target = $region25
    $region24: #{tpu_custom_call.1} parent=1 // pred_region
      %v106 = vld [vmem:[#allocation2] sm:$0xff]
      %v107 = vadd.f32 %v97, %v98
      %v108 = vadd.f32 %v106, %v107
      %109 = vst [vmem:[#allocation2] sm:$0xff] %v108
    $region25: #{tpu_custom_call.1} parent=1 // pred_fallthru
      _
    %p110 = scmp.gt.s32.totalorder %s101, 16
    // Predicated region
    $region26: #{tpu_custom_call.1} parent=1 // pred_check
      %p111 = pneg %p110
    $region27: #{tpu_custom_call.1} parent=1 // pred_check_branch
      %113 = sbr.rel (%p111) target = $region29
    $region28: #{tpu_custom_call.1} parent=1 // pred_region
      %v114 = vlaneseq
      %v115 = vshrl.u32 %v114, 7
      %v116 = vadd.s32 %v115, 8
      %v117 = vstv %s100
      %v118 = vadd.s32 %v117, %v115
      %v119 = vadd.s32 %v117, %v116
      %vm120 = vcmp.lt.s32.totalorder %v118, 16
      %vm121 = vcmp.lt.s32.totalorder %v119, 16
      %v122 = vsel %vm120, %v97, 0.0
      %v123 = vsel %vm121, %v98, 0.0
      %v124 = vld [vmem:[#allocation2] sm:$0xff]
      %v125 = vadd.f32 %v122, %v123
      %v126 = vadd.f32 %v124, %v125
      %127 = vst [vmem:[#allocation2] sm:$0xff] %v126
    $region29: #{tpu_custom_call.1} parent=1 // pred_fallthru
      _
    // Predicated region
    $region30: #{tpu_custom_call.1} parent=1 // pred_check
      %p128 = pneg %p56
    $region31: #{tpu_custom_call.1} parent=1 // pred_check_branch
      %130 = sbr.rel (%p128) target = $region33
    $region32: #{tpu_custom_call.1} parent=1 // pred_region
      %v131 = vld [vmem:[#allocation2] sm:$0xff]
      %132 = vst [vmem:[#allocation8] sm:$0xff] %v131
    $region33: #{tpu_custom_call.1} parent=1 // pred_fallthru
      _
    // Predicated region
    $region34: #{tpu_custom_call.1} parent=1 // pred_check
      _
    $region35: #{tpu_custom_call.1} parent=1 // pred_check_branch
      %134 = sbr.rel (0) target = $region37
    $region36: #{tpu_custom_call.1} parent=1 // pred_region
      %136 = vsyncadd [#allocation5], 0
      %s138 = sshll.u32 [#allocation8], 4
      %s139 = int_to_ptr.vmem [resolvable:$true] %s138
      %s140 = sshll.u32 %s2, 4
      %s141 = int_to_ptr.hbm [resolvable:$true] %s140
      %143 = dma.vmem_to_hbm [thread:$0]  %s139, 128, %s141, [#allocation5]
    $region37: #{tpu_custom_call.1} parent=1 // pred_fallthru
      _
    // Predicated region
    $region38: #{tpu_custom_call.1} parent=1 // pred_check
      _
    $region39: #{tpu_custom_call.1} parent=1 // pred_check_branch
      %145 = sbr.rel (0) target = $region41
    $region40: #{tpu_custom_call.1} parent=1 // pred_region
      %147 = dma.done [#allocation5], 128
    $region41: #{tpu_custom_call.1} parent=1 // pred_fallthru
      _
    %148 = vsyncpa [#allocation4], 1
    %149 = vsyncpa [#allocation7], 1
    %150 = vsyncpa [#allocation5], 1

</llo_original>
